<compile_context>
chip_gen: v6e
topology: v6e:2x2x1
jax: 0.10.0
libtpu: 0.0.40
codegen_flags: <defaults>
</compile_context>

<pallas_src>
import jax
import jax.numpy as jnp
from jax.experimental import pallas as pl
from jax.experimental.pallas import tpu as pltpu


def _mlp_kernel(x_ref, w1_ref, b1_ref, a1_ref,
                w2_ref, b2_ref, a2_ref,
                w3_ref, b3_ref, o_ref, acc_ref):
    k = pl.program_id(1)

    @pl.when(k == 0)
    def _():
        acc_ref[...] = jnp.zeros_like(acc_ref)

    # layer_1 partial product for this K tile: bf16 streams, f32 accumulation.
    acc_ref[...] += jnp.dot(x_ref[...], w1_ref[...],
                            preferred_element_type=jnp.float32)

    @pl.when(k == pl.num_programs(1) - 1)
    def _():
        # layer_1 epilogue: bias + PReLU (single shared slope, PyTorch default).
        h1 = acc_ref[...] + b1_ref[...]
        a1 = a1_ref[0]
        h1 = jnp.where(h1 >= 0.0, h1, a1 * h1)

        # layer_2: Linear(nc -> nc) + PReLU + Sigmoid (exp + approx recip on EUP).
        h2 = jnp.dot(h1, w2_ref[...], preferred_element_type=jnp.float32) + b2_ref[...]
        a2 = a2_ref[0]
        h2 = jnp.where(h2 >= 0.0, h2, a2 * h2)
        h2 = pl.reciprocal(1.0 + jnp.exp(-h2), approx=True)

        # layer_3: Linear(nc -> 2), lane-padded to 128 for an unmasked store.
        out = jnp.dot(h2, w3_ref[...], preferred_element_type=jnp.float32) + b3_ref[...]
        o_ref[...] = out.astype(o_ref.dtype)


def _pick_tile(dim, max_tile, quantum):
    """Largest multiple of `quantum` that divides `dim` and is <= max_tile."""
    best = None
    t = quantum
    cap = min(dim, max_tile)
    while t <= cap:
        if dim % t == 0:
            best = t
        t += quantum
    return best if best is not None else dim


def feature_block_discriminator2(x, params, *, block_b=256, block_k=4096):
    """x: (B, C, H, W) float32.  Returns (B, 2) float32."""
    B = x.shape[0]
    D = x.shape[1] * x.shape[2] * x.shape[3]
    x_flat = x.reshape(B, D).astype(jnp.bfloat16)        # bf16 activation stream

    w1t, b1, a1, w2t, b2, a2, w3t, b3 = params
    assert w1t.shape[0] == D, "layer_1 in_features must match flattened size"
    nc = w1t.shape[1]

    w1t_bf16 = w1t.astype(jnp.bfloat16)                  # bf16 weight stream

    # Lane-dense output: pad layer_3 to 128 lanes; slice [:, :2] after the call.
    OUT_LANES = 128
    w3t_pad = jnp.zeros((nc, OUT_LANES), jnp.float32).at[:, :w3t.shape[1]].set(w3t)
    b3_pad = jnp.zeros((1, OUT_LANES), jnp.float32).at[:, :b3.shape[1]].set(b3)

    tb = B if B < 8 else _pick_tile(B, block_b, 8)
    tk = _pick_tile(D, block_k, 128)
    nb, nk = B // tb, D // tk

    vmem_full = lambda shape: pl.BlockSpec(shape, lambda i, k: (0, 0))
    smem = pl.BlockSpec(memory_space=pltpu.MemorySpace.SMEM)

    cost = pl.CostEstimate(
        flops=2 * B * D * nc + 2 * B * nc * nc + 2 * B * nc * OUT_LANES,
        transcendentals=B * nc,
        bytes_accessed=(B * D + D * nc) * 2                     # bf16 streams
        + (nc * nc + 2 * nc + nc * OUT_LANES + OUT_LANES) * 4   # small f32 params
        + B * OUT_LANES * 4,                                    # output
    )

    out_pad = pl.pallas_call(
        _mlp_kernel,
        out_shape=jax.ShapeDtypeStruct((B, OUT_LANES), jnp.float32),
        grid_spec=pltpu.PrefetchScalarGridSpec(
            num_scalar_prefetch=0,
            grid=(nb, nk),
            in_specs=[
                pl.BlockSpec((tb, tk), lambda i, k: (i, k)),    # x_flat  (B, D)
                pl.BlockSpec((tk, nc), lambda i, k: (k, 0)),    # w1t     (D, nc)
                vmem_full((1, nc)),                             # b1
                smem,                                           # a1 (PReLU slope)
                vmem_full((nc, nc)),                            # w2t
                vmem_full((1, nc)),                             # b2
                smem,                                           # a2 (PReLU slope)
                vmem_full((nc, OUT_LANES)),                     # w3t (lane-padded)
                vmem_full((1, OUT_LANES)),                      # b3  (lane-padded)
            ],
            out_specs=pl.BlockSpec((tb, OUT_LANES), lambda i, k: (i, 0)),
            scratch_shapes=[pltpu.VMEM((tb, nc), jnp.float32)],  # layer-1 accumulator
        ),
        compiler_params=pltpu.CompilerParams(
            dimension_semantics=("parallel", "arbitrary"),
            vmem_limit_bytes=48 * 1024 * 1024,
        ),
        cost_estimate=cost,
    )(x_flat, w1t_bf16, b1, a1, w2t, b2, a2, w3t_pad, b3_pad)

    return out_pad[:, :2]


def init_params(key, in_features, input_nc):
    """Deterministic synthetic init matching the module's parameter shapes."""
    ks = jax.random.split(key, 6)
    # Linear weights stored transposed as (in, out); PyTorch stores (out, in).
    w1t = (jax.random.normal(ks[0], (in_features, input_nc), jnp.float32)
           * (1.0 / jnp.sqrt(in_features)))
    b1 = jax.random.normal(ks[1], (1, input_nc), jnp.float32) * 0.01
    w2t = (jax.random.normal(ks[2], (input_nc, input_nc), jnp.float32)
           * (1.0 / jnp.sqrt(input_nc)))
    b2 = jax.random.normal(ks[3], (1, input_nc), jnp.float32) * 0.01
    w3t = (jax.random.normal(ks[4], (input_nc, 2), jnp.float32)
           * (1.0 / jnp.sqrt(input_nc)))
    b3 = jax.random.normal(ks[5], (1, 2), jnp.float32) * 0.01
    # nn.PReLU() default: single parameter initialized to 0.25
    a1 = jnp.array([0.25], jnp.float32)
    a2 = jnp.array([0.25], jnp.float32)
    return w1t, b1, a1, w2t, b2, a2, w3t, b3


def _reference(x, params):
    """Pure-JAX reference (same bf16-rounded layer-1 inputs, f32 accumulation)."""
    w1t, b1, a1, w2t, b2, a2, w3t, b3 = params
    B = x.shape[0]
    xf = x.reshape(B, -1).astype(jnp.bfloat16).astype(jnp.float32)
    w1 = w1t.astype(jnp.bfloat16).astype(jnp.float32)
    h1 = xf @ w1 + b1
    h1 = jnp.where(h1 >= 0, h1, a1[0] * h1)
    h2 = h1 @ w2t + b2
    h2 = jnp.where(h2 >= 0, h2, a2[0] * h2)
    h2 = jax.nn.sigmoid(h2)
    return h2 @ w3t + b3


if __name__ == "__main__":
    B, C, H, W = 2, 4, 16, 16          # small shapes; D = C*H*W = 1024
    input_nc = 32
    D = C * H * W

    key = jax.random.PRNGKey(0)
    kx, kp = jax.random.split(key)
    x = jax.random.normal(kx, (B, C, H, W), jnp.float32)
    params = init_params(kp, D, input_nc)

    # block_k=256 -> 4 K-steps at this toy D, exercising the accumulator/epilogue path.
    out = feature_block_discriminator2(x, params, block_k=256)
    out = jax.block_until_ready(out)

    ref = _reference(x, params)
    assert out.shape == (B, 2)
    assert jnp.allclose(out, ref, atol=5e-3, rtol=5e-3), (out, ref)

    print("KERNEL_OK")
</pallas_src>

<mosaic_0001>
module attributes {stable_mosaic.version = 11 : i64} {
  func.func @_mlp_kernel(%arg0: i32, %arg1: i32, %arg2: memref<2x256xbf16, #tpu.memory_space<vmem>>, %arg3: memref<256x32xbf16, #tpu.memory_space<vmem>>, %arg4: memref<1x32xf32, #tpu.memory_space<vmem>>, %arg5: memref<1xf32, #tpu.memory_space<smem>>, %arg6: memref<32x32xf32, #tpu.memory_space<vmem>>, %arg7: memref<1x32xf32, #tpu.memory_space<vmem>>, %arg8: memref<1xf32, #tpu.memory_space<smem>>, %arg9: memref<32x128xf32, #tpu.memory_space<vmem>>, %arg10: memref<1x128xf32, #tpu.memory_space<vmem>>, %arg11: memref<2x128xf32, #tpu.memory_space<vmem>>, %arg12: memref<2x32xf32, #tpu.memory_space<vmem>>) attributes {dimension_semantics = [#tpu.dimension_semantics<parallel>, #tpu.dimension_semantics<arbitrary>], iteration_bounds = array<i64: 1, 4>, scalar_prefetch = 0 : i64, scratch_operands = 1 : i64, tpu.core_type = #tpu.core_type<tc>, window_params = [{transform_indices = @transform_0, window_bounds = array<i64: 2, 256>}, {transform_indices = @transform_1, window_bounds = array<i64: 256, 32>}, {pipeline_mode = #tpu.pipeline_mode<synchronous>, transform_indices = @transform_2, window_bounds = array<i64: 1, 32>}, {transform_indices = @transform_3, window_bounds = array<i64: 1>}, {pipeline_mode = #tpu.pipeline_mode<synchronous>, transform_indices = @transform_4, window_bounds = array<i64: 32, 32>}, {pipeline_mode = #tpu.pipeline_mode<synchronous>, transform_indices = @transform_5, window_bounds = array<i64: 1, 32>}, {transform_indices = @transform_6, window_bounds = array<i64: 1>}, {pipeline_mode = #tpu.pipeline_mode<synchronous>, transform_indices = @transform_7, window_bounds = array<i64: 32, 128>}, {pipeline_mode = #tpu.pipeline_mode<synchronous>, transform_indices = @transform_8, window_bounds = array<i64: 1, 128>}, {transform_indices = @transform_9, window_bounds = array<i64: 2, 128>}]} {
    %c0_i32 = arith.constant 0 : i32
    %0 = arith.cmpi eq, %arg1, %c0_i32 : i32
    %1 = arith.extui %0 : i1 to i32
    %c0_i32_0 = arith.constant 0 : i32
    %2 = arith.cmpi ne, %1, %c0_i32_0 : i32
    scf.if %2 {
      %cst_9 = arith.constant 0.000000e+00 : f32
      %12 = vector.broadcast %cst_9 : f32 to vector<2x32xf32>
      %c0_10 = arith.constant 0 : index
      %c0_11 = arith.constant 0 : index
      %13 = vector.load %arg12[%c0_10, %c0_11] : memref<2x32xf32, #tpu.memory_space<vmem>>, vector<2x32xf32>
      tpu.vector_store %arg12[%c0_10, %c0_11], %12 {strides = array<i32>} : memref<2x32xf32, #tpu.memory_space<vmem>>, vector<2x32xf32>,
    } else {
    }
    %c0 = arith.constant 0 : index
    %c0_1 = arith.constant 0 : index
    %3 = vector.load %arg12[%c0, %c0_1] : memref<2x32xf32, #tpu.memory_space<vmem>>, vector<2x32xf32>
    %c0_2 = arith.constant 0 : index
    %c0_3 = arith.constant 0 : index
    %4 = vector.load %arg2[%c0_2, %c0_3] : memref<2x256xbf16, #tpu.memory_space<vmem>>, vector<2x256xbf16>
    %c0_4 = arith.constant 0 : index
    %c0_5 = arith.constant 0 : index
    %5 = vector.load %arg3[%c0_4, %c0_5] : memref<256x32xbf16, #tpu.memory_space<vmem>>, vector<256x32xbf16>
    %cst = arith.constant dense<0.000000e+00> : vector<2x32xf32>
    %6 = tpu.matmul %4, %5, %cst {dimension_numbers = #tpu.dot_dimension_numbers<[1], [0], [0], [1], [0, 0, 1, 1], [], []>} : vector<2x256xbf16>, vector<256x32xbf16>, vector<2x32xf32> -> vector<2x32xf32>
    %7 = arith.addf %3, %6 : vector<2x32xf32>
    %c0_6 = arith.constant 0 : index
    %c0_7 = arith.constant 0 : index
    %8 = vector.load %arg12[%c0_6, %c0_7] : memref<2x32xf32, #tpu.memory_space<vmem>>, vector<2x32xf32>
    tpu.vector_store %arg12[%c0_6, %c0_7], %7 {strides = array<i32>} : memref<2x32xf32, #tpu.memory_space<vmem>>, vector<2x32xf32>,
    %c3_i32 = arith.constant 3 : i32
    %9 = arith.cmpi eq, %arg1, %c3_i32 : i32
    %10 = arith.extui %9 : i1 to i32
    %c0_i32_8 = arith.constant 0 : i32
    %11 = arith.cmpi ne, %10, %c0_i32_8 : i32
    scf.if %11 {
      %c0_9 = arith.constant 0 : index
      %c0_10 = arith.constant 0 : index
      %12 = vector.load %arg12[%c0_9, %c0_10] : memref<2x32xf32, #tpu.memory_space<vmem>>, vector<2x32xf32>
      %c0_11 = arith.constant 0 : index
      %c0_12 = arith.constant 0 : index
      %13 = vector.load %arg4[%c0_11, %c0_12] : memref<1x32xf32, #tpu.memory_space<vmem>>, vector<1x32xf32>
      %14 = vector.broadcast %13 : vector<1x32xf32> to vector<2x32xf32>
      %15 = arith.addf %12, %14 : vector<2x32xf32>
      %c0_13 = arith.constant 0 : index
      %16 = memref.load %arg5[%c0_13] : memref<1xf32, #tpu.memory_space<smem>>
      %cst_14 = arith.constant 0.000000e+00 : f32
      %17 = vector.broadcast %cst_14 : f32 to vector<2x32xf32>
      %18 = arith.cmpf oge, %15, %17 : vector<2x32xf32>
      %19 = vector.broadcast %16 : f32 to vector<2x32xf32>
      %20 = arith.mulf %19, %15 : vector<2x32xf32>
      %21 = arith.select %18, %15, %20 : vector<2x32xi1>, vector<2x32xf32>
      %c0_15 = arith.constant 0 : index
      %c0_16 = arith.constant 0 : index
      %22 = vector.load %arg6[%c0_15, %c0_16] : memref<32x32xf32, #tpu.memory_space<vmem>>, vector<32x32xf32>
      %cst_17 = arith.constant dense<0.000000e+00> : vector<2x32xf32>
      %23 = tpu.matmul %21, %22, %cst_17 {dimension_numbers = #tpu.dot_dimension_numbers<[1], [0], [0], [1], [0, 0, 1, 1], [], []>} : vector<2x32xf32>, vector<32x32xf32>, vector<2x32xf32> -> vector<2x32xf32>
      %c0_18 = arith.constant 0 : index
      %c0_19 = arith.constant 0 : index
      %24 = vector.load %arg7[%c0_18, %c0_19] : memref<1x32xf32, #tpu.memory_space<vmem>>, vector<1x32xf32>
      %25 = vector.broadcast %24 : vector<1x32xf32> to vector<2x32xf32>
      %26 = arith.addf %23, %25 : vector<2x32xf32>
      %c0_20 = arith.constant 0 : index
      %27 = memref.load %arg8[%c0_20] : memref<1xf32, #tpu.memory_space<smem>>
      %cst_21 = arith.constant 0.000000e+00 : f32
      %28 = vector.broadcast %cst_21 : f32 to vector<2x32xf32>
      %29 = arith.cmpf oge, %26, %28 : vector<2x32xf32>
      %30 = vector.broadcast %27 : f32 to vector<2x32xf32>
      %31 = arith.mulf %30, %26 : vector<2x32xf32>
      %32 = arith.select %29, %26, %31 : vector<2x32xi1>, vector<2x32xf32>
      %cst_22 = arith.constant 0.000000e+00 : f32
      %33 = vector.broadcast %cst_22 : f32 to vector<2x32xf32>
      %34 = arith.subf %33, %32 : vector<2x32xf32>
      %35 = math.exp %34 : vector<2x32xf32>
      %cst_23 = arith.constant 1.000000e+00 : f32
      %36 = vector.broadcast %cst_23 : f32 to vector<2x32xf32>
      %37 = arith.addf %36, %35 : vector<2x32xf32>
      %38 = tpu.reciprocal %37 {approx = true} : vector<2x32xf32> -> vector<2x32xf32>
      %c0_24 = arith.constant 0 : index
      %c0_25 = arith.constant 0 : index
      %39 = vector.load %arg9[%c0_24, %c0_25] : memref<32x128xf32, #tpu.memory_space<vmem>>, vector<32x128xf32>
      %cst_26 = arith.constant dense<0.000000e+00> : vector<2x128xf32>
      %40 = tpu.matmul %38, %39, %cst_26 {dimension_numbers = #tpu.dot_dimension_numbers<[1], [0], [0], [1], [0, 0, 1, 1], [], []>} : vector<2x32xf32>, vector<32x128xf32>, vector<2x128xf32> -> vector<2x128xf32>
      %c0_27 = arith.constant 0 : index
      %c0_28 = arith.constant 0 : index
      %41 = vector.load %arg10[%c0_27, %c0_28] : memref<1x128xf32, #tpu.memory_space<vmem>>, vector<1x128xf32>
      %42 = vector.broadcast %41 : vector<1x128xf32> to vector<2x128xf32>
      %43 = arith.addf %40, %42 : vector<2x128xf32>
      %c0_29 = arith.constant 0 : index
      %c0_30 = arith.constant 0 : index
      %44 = vector.load %arg11[%c0_29, %c0_30] : memref<2x128xf32, #tpu.memory_space<vmem>>, vector<2x128xf32>
      tpu.vector_store %arg11[%c0_29, %c0_30], %43 {strides = array<i32>} : memref<2x128xf32, #tpu.memory_space<vmem>>, vector<2x128xf32>,
    } else {
    }
    return
  }
  func.func @transform_0(%arg0: i32, %arg1: i32) -> (i32, i32) {
    %c0_i32 = arith.constant 0 : i32
    return %arg0, %arg1 : i32, i32
  }
  func.func @transform_1(%arg0: i32, %arg1: i32) -> (i32, i32) {
    %c0_i32 = arith.constant 0 : i32
    %c0_i32_0 = arith.constant 0 : i32
    return %arg1, %c0_i32 : i32, i32
  }
  func.func @transform_2(%arg0: i32, %arg1: i32) -> (i32, i32) {
    %c0_i32 = arith.constant 0 : i32
    %c0_i32_0 = arith.constant 0 : i32
    %c0_i32_1 = arith.constant 0 : i32
    return %c0_i32, %c0_i32_0 : i32, i32
  }
  func.func @transform_3(%arg0: i32, %arg1: i32) -> i32 {
    %c0_i32 = arith.constant 0 : i32
    %c0_i32_0 = arith.constant 0 : i32
    return %c0_i32 : i32
  }
  func.func @transform_4(%arg0: i32, %arg1: i32) -> (i32, i32) {
    %c0_i32 = arith.constant 0 : i32
    %c0_i32_0 = arith.constant 0 : i32
    %c0_i32_1 = arith.constant 0 : i32
    return %c0_i32, %c0_i32_0 : i32, i32
  }
  func.func @transform_5(%arg0: i32, %arg1: i32) -> (i32, i32) {
    %c0_i32 = arith.constant 0 : i32
    %c0_i32_0 = arith.constant 0 : i32
    %c0_i32_1 = arith.constant 0 : i32
    return %c0_i32, %c0_i32_0 : i32, i32
  }
  func.func @transform_6(%arg0: i32, %arg1: i32) -> i32 {
    %c0_i32 = arith.constant 0 : i32
    %c0_i32_0 = arith.constant 0 : i32
    return %c0_i32 : i32
  }
  func.func @transform_7(%arg0: i32, %arg1: i32) -> (i32, i32) {
    %c0_i32 = arith.constant 0 : i32
    %c0_i32_0 = arith.constant 0 : i32
    %c0_i32_1 = arith.constant 0 : i32
    return %c0_i32, %c0_i32_0 : i32, i32
  }
  func.func @transform_8(%arg0: i32, %arg1: i32) -> (i32, i32) {
    %c0_i32 = arith.constant 0 : i32
    %c0_i32_0 = arith.constant 0 : i32
    %c0_i32_1 = arith.constant 0 : i32
    return %c0_i32, %c0_i32_0 : i32, i32
  }
  func.func @transform_9(%arg0: i32, %arg1: i32) -> (i32, i32) {
    %c0_i32 = arith.constant 0 : i32
    %c0_i32_0 = arith.constant 0 : i32
    return %arg0, %c0_i32 : i32, i32
  }
}

</mosaic_0001>

<llo_original>
// kernel: tpu_custom_call.1
$region0: #{tpu_custom_call.1}
  #allocation0 [shape = 'u32[]', space=smem, size = 0x4, offset = 0x4, fixed_abs, tag = 'smem constant byte address 0x4 - core index']
  #allocation1 [shape = 'u32[144,128]{1,0:T(1,128)}', space=vmem, size = 0x12000, scoped, tag = 'internal scratch']
  #allocation2 [shape = 'f32[2,32]{1,0:T(2,128)}', space=vmem, size = 0x400, scoped, tag = 'scratch operand']
  #allocation3 [shape = 'f32[1]{0:T(128)S(6)}', space=smem, size = 0x200, scoped, tag = 'scoped memory for tpu_custom_call.1']
  #allocation4 [shape = 'f32[1]{0:T(128)S(6)}', space=smem, size = 0x200, scoped, tag = 'scoped memory for tpu_custom_call.1']
  %s0 = inlined_call_operand.vmem [shape: bf16[2,1024], index: 0, kind: input, shape index: {}]
  %s1 = inlined_call_operand.vmem [shape: bf16[1024,32], index: 1, kind: input, shape index: {}]
  %s2 = inlined_call_operand.vmem [shape: f32[1,32], index: 2, kind: input, shape index: {}]
  %s3 = inlined_call_operand.<no memory space> [shape: f32[1], index: 3, kind: input, shape index: {}]
  %s4 = inlined_call_operand.vmem [shape: f32[32,32], index: 4, kind: input, shape index: {}]
  %s5 = inlined_call_operand.vmem [shape: f32[1,32], index: 5, kind: input, shape index: {}]
  %s6 = inlined_call_operand.<no memory space> [shape: f32[1], index: 6, kind: input, shape index: {}]
  %s7 = inlined_call_operand.vmem [shape: f32[32,128], index: 7, kind: input, shape index: {}]
  %s8 = inlined_call_operand.vmem [shape: f32[1,128], index: 8, kind: input, shape index: {}]
  %s9 = inlined_call_operand.hbm [shape: f32[2,128], index: 9, kind: output, shape index: {}]
  %s10 = sld [smem:[#allocation0]]
  $region77: #{tpu_custom_call.1} parent=0
    _
  %s12 = ssub.s32 1, %s10
  %s13 = scalar_select 0, %s12, %s10
  %14 = sst [smem:[#allocation3]] %s3
  %15 = sst [smem:[#allocation4]] %s6
  $region1: #{tpu_custom_call.1} parent=0
    #allocation5 [shape = 'u8[1024]{0}', space=vmem, size = 0x400, scoped, tag = 'output window, operand 0, single buffered']
    #allocation6 [shape = 's32[2]{0}', space=sflag, size = 0x8, scoped, tag = 'scoped memory for tpu_custom_call.1']
    %16 = vsyncpa [#allocation6], 0
    loop: start=0, step=1, limit=6
    $region2: #{tpu_custom_call.1} parent=1 // loop_pre_header
      _
    $region3: #{tpu_custom_call.1} parent=1 // loop_header
      %s18 = sphi 0, %s22
      %p19 = scmp.ge.s32.totalorder %s18, 6
      %s25 = sphi 0, %s37
      %s26 = sphi 0, %s33
      %s27 = sphi 0, %s25
      %s28 = sphi 0, %s26
      %s29 = sphi 0, %s27
      %s30 = sphi 0, %s28
      %s42 = sphi 0, %s44
      %s45 = sphi 0, %s42
      %s46 = sphi 0, %s45
      %s62 = sphi 0, %s46
      %s68 = sphi 0, %s70
      %s71 = sphi 0, %s68
      %s72 = sphi 0, %s71
      %s88 = sphi 0, %s72
      %s92 = sphi 0, %s92
      %s94 = sphi 0, %s92
      %s95 = sphi 0, %s94
      %s109 = sphi 0, %s95
      %s113 = sphi 0, %s113
      %s115 = sphi 0, %s113
      %s116 = sphi 0, %s115
      %s130 = sphi 0, %s116
      %s134 = sphi 0, %s134
      %s136 = sphi 0, %s134
      %s137 = sphi 0, %s136
      %s151 = sphi 0, %s137
      %s155 = sphi 0, %s155
      %s157 = sphi 0, %s155
      %s158 = sphi 0, %s157
      %s172 = sphi 0, %s158
      %s176 = sphi 0, %s176
      %s178 = sphi 0, %s176
      %s179 = sphi 0, %s178
      %s193 = sphi 0, %s179
      %s197 = sphi 0, %s197
      %s199 = sphi 0, %s197
      %s200 = sphi 0, %s199
      %s214 = sphi 0, %s200
      %s218 = sphi 0, %s218
      %s220 = sphi 0, %s218
      %s221 = sphi 0, %s220
      %s235 = sphi 0, %s221
      %s241 = sphi 0, %s243
      %s244 = sphi 0, %s241
      %s245 = sphi 0, %s244
      %s261 = sphi 0, %s245
    $region4: #{tpu_custom_call.1} parent=1 // loop_header_branch
      %21 = sbr.rel (%p19) target = $region8
    $region5: #{tpu_custom_call.1} parent=1 // loop_body
      %s23 = ssub.s32 %s18, 1
      %s24 = ssub.s32 %s18, 2
      %s31 = sadd.s32 1, %s26
      %p32 = scmp.ge.s32.totalorder %s31, 4
      %s33 = scalar_select %p32, 0, %s31
      %s34 = sadd.s32 1, %s25
      %s35 = scalar_select %p32, %s34, %s25
      %p36 = scmp.ge.s32.totalorder %s35, 1
      %s37 = scalar_select %p36, 0, %s35
      %s38 = ssub.s32 %s25, %s37
      %s39 = ssub.s32 %s26, %s33
      %s40 = sor.u32 %s38, %s39
      %p41 = scmp.eq.s32.totalorder %s40, 0
      %s43 = sadd.s32 %s42, 1
      %s44 = scalar_select %p41, %s42, %s43
      %p47 = pneg %p41
      %p48 = scmp.eq.s32.totalorder %s18, 3
      %p49 = por %p47, %p48
      %p50 = scmp.ne.s32.totalorder %s42, %s45
      %p51 = scmp.eq.s32.totalorder %s18, 0
      %p52 = por %p50, %p51
      %p53 = scmp.ne.s32.totalorder %s42, %s45
      %p54 = scmp.eq.s32.totalorder %s23, 3
      %p55 = por %p53, %p54
      %p56 = scmp.ne.s32.totalorder %s45, %s46
      %p57 = scmp.eq.s32.totalorder %s23, 0
      %p58 = por %p56, %p57
      %p59 = scmp.ne.s32.totalorder %s45, %s46
      %p60 = scmp.eq.s32.totalorder %s24, 3
      %p61 = por %p59, %p60
      %p63 = scmp.ne.s32.totalorder %s46, %s62
      %p64 = scmp.eq.s32.totalorder %s24, 0
      %p65 = por %p63, %p64
      %s66 = ssub.s32 %s26, %s33
      %p67 = scmp.eq.s32.totalorder %s66, 0
      %s69 = sadd.s32 %s68, 1
      %s70 = scalar_select %p67, %s68, %s69
      %p73 = pneg %p67
      %p74 = scmp.eq.s32.totalorder %s18, 3
      %p75 = por %p73, %p74
      %p76 = scmp.ne.s32.totalorder %s68, %s71
      %p77 = scmp.eq.s32.totalorder %s18, 0
      %p78 = por %p76, %p77
      %p79 = scmp.ne.s32.totalorder %s68, %s71
      %p80 = scmp.eq.s32.totalorder %s23, 3
      %p81 = por %p79, %p80
      %p82 = scmp.ne.s32.totalorder %s71, %s72
      %p83 = scmp.eq.s32.totalorder %s23, 0
      %p84 = por %p82, %p83
      %p85 = scmp.ne.s32.totalorder %s71, %s72
      %p86 = scmp.eq.s32.totalorder %s24, 3
      %p87 = por %p85, %p86
      %p89 = scmp.ne.s32.totalorder %s72, %s88
      %p90 = scmp.eq.s32.totalorder %s24, 0
      %p91 = por %p89, %p90
      %s93 = sadd.s32 %s92, 1
      %p96 = scmp.eq.s32.totalorder %s18, 3
      %p97 = scmp.ne.s32.totalorder %s92, %s94
      %p98 = scmp.eq.s32.totalorder %s18, 0
      %p99 = por %p97, %p98
      %p100 = scmp.ne.s32.totalorder %s92, %s94
      %p101 = scmp.eq.s32.totalorder %s23, 3
      %p102 = por %p100, %p101
      %p103 = scmp.ne.s32.totalorder %s94, %s95
      %p104 = scmp.eq.s32.totalorder %s23, 0
      %p105 = por %p103, %p104
      %p106 = scmp.ne.s32.totalorder %s94, %s95
      %p107 = scmp.eq.s32.totalorder %s24, 3
      %p108 = por %p106, %p107
      %p110 = scmp.ne.s32.totalorder %s95, %s109
      %p111 = scmp.eq.s32.totalorder %s24, 0
      %p112 = por %p110, %p111
      %s114 = sadd.s32 %s113, 1
      %p117 = scmp.eq.s32.totalorder %s18, 3
      %p118 = scmp.ne.s32.totalorder %s113, %s115
      %p119 = scmp.eq.s32.totalorder %s18, 0
      %p120 = por %p118, %p119
      %p121 = scmp.ne.s32.totalorder %s113, %s115
      %p122 = scmp.eq.s32.totalorder %s23, 3
      %p123 = por %p121, %p122
      %p124 = scmp.ne.s32.totalorder %s115, %s116
      %p125 = scmp.eq.s32.totalorder %s23, 0
      %p126 = por %p124, %p125
      %p127 = scmp.ne.s32.totalorder %s115, %s116
      %p128 = scmp.eq.s32.totalorder %s24, 3
      %p129 = por %p127, %p128
      %p131 = scmp.ne.s32.totalorder %s116, %s130
      %p132 = scmp.eq.s32.totalorder %s24, 0
      %p133 = por %p131, %p132
      %s135 = sadd.s32 %s134, 1
      %p138 = scmp.eq.s32.totalorder %s18, 3
      %p139 = scmp.ne.s32.totalorder %s134, %s136
      %p140 = scmp.eq.s32.totalorder %s18, 0
      %p141 = por %p139, %p140
      %p142 = scmp.ne.s32.totalorder %s134, %s136
      %p143 = scmp.eq.s32.totalorder %s23, 3
      %p144 = por %p142, %p143
      %p145 = scmp.ne.s32.totalorder %s136, %s137
      %p146 = scmp.eq.s32.totalorder %s23, 0
      %p147 = por %p145, %p146
      %p148 = scmp.ne.s32.totalorder %s136, %s137
      %p149 = scmp.eq.s32.totalorder %s24, 3
      %p150 = por %p148, %p149
      %p152 = scmp.ne.s32.totalorder %s137, %s151
      %p153 = scmp.eq.s32.totalorder %s24, 0
      %p154 = por %p152, %p153
      %s156 = sadd.s32 %s155, 1
      %p159 = scmp.eq.s32.totalorder %s18, 3
      %p160 = scmp.ne.s32.totalorder %s155, %s157
      %p161 = scmp.eq.s32.totalorder %s18, 0
      %p162 = por %p160, %p161
      %p163 = scmp.ne.s32.totalorder %s155, %s157
      %p164 = scmp.eq.s32.totalorder %s23, 3
      %p165 = por %p163, %p164
      %p166 = scmp.ne.s32.totalorder %s157, %s158
      %p167 = scmp.eq.s32.totalorder %s23, 0
      %p168 = por %p166, %p167
      %p169 = scmp.ne.s32.totalorder %s157, %s158
      %p170 = scmp.eq.s32.totalorder %s24, 3
      %p171 = por %p169, %p170
      %p173 = scmp.ne.s32.totalorder %s158, %s172
      %p174 = scmp.eq.s32.totalorder %s24, 0
      %p175 = por %p173, %p174
      %s177 = sadd.s32 %s176, 1
      %p180 = scmp.eq.s32.totalorder %s18, 3
      %p181 = scmp.ne.s32.totalorder %s176, %s178
      %p182 = scmp.eq.s32.totalorder %s18, 0
      %p183 = por %p181, %p182
      %p184 = scmp.ne.s32.totalorder %s176, %s178
      %p185 = scmp.eq.s32.totalorder %s23, 3
      %p186 = por %p184, %p185
      %p187 = scmp.ne.s32.totalorder %s178, %s179
      %p188 = scmp.eq.s32.totalorder %s23, 0
      %p189 = por %p187, %p188
      %p190 = scmp.ne.s32.totalorder %s178, %s179
      %p191 = scmp.eq.s32.totalorder %s24, 3
      %p192 = por %p190, %p191
      %p194 = scmp.ne.s32.totalorder %s179, %s193
      %p195 = scmp.eq.s32.totalorder %s24, 0
      %p196 = por %p194, %p195
      %s198 = sadd.s32 %s197, 1
      %p201 = scmp.eq.s32.totalorder %s18, 3
      %p202 = scmp.ne.s32.totalorder %s197, %s199
      %p203 = scmp.eq.s32.totalorder %s18, 0
      %p204 = por %p202, %p203
      %p205 = scmp.ne.s32.totalorder %s197, %s199
      %p206 = scmp.eq.s32.totalorder %s23, 3
      %p207 = por %p205, %p206
      %p208 = scmp.ne.s32.totalorder %s199, %s200
      %p209 = scmp.eq.s32.totalorder %s23, 0
      %p210 = por %p208, %p209
      %p211 = scmp.ne.s32.totalorder %s199, %s200
      %p212 = scmp.eq.s32.totalorder %s24, 3
      %p213 = por %p211, %p212
      %p215 = scmp.ne.s32.totalorder %s200, %s214
      %p216 = scmp.eq.s32.totalorder %s24, 0
      %p217 = por %p215, %p216
      %s219 = sadd.s32 %s218, 1
      %p222 = scmp.eq.s32.totalorder %s18, 3
      %p223 = scmp.ne.s32.totalorder %s218, %s220
      %p224 = scmp.eq.s32.totalorder %s18, 0
      %p225 = por %p223, %p224
      %p226 = scmp.ne.s32.totalorder %s218, %s220
      %p227 = scmp.eq.s32.totalorder %s23, 3
      %p228 = por %p226, %p227
      %p229 = scmp.ne.s32.totalorder %s220, %s221
      %p230 = scmp.eq.s32.totalorder %s23, 0
      %p231 = por %p229, %p230
      %p232 = scmp.ne.s32.totalorder %s220, %s221
      %p233 = scmp.eq.s32.totalorder %s24, 3
      %p234 = por %p232, %p233
      %p236 = scmp.ne.s32.totalorder %s221, %s235
      %p237 = scmp.eq.s32.totalorder %s24, 0
      %p238 = por %p236, %p237
      %s239 = ssub.s32 %s25, %s37
      %p240 = scmp.eq.s32.totalorder %s239, 0
      %s242 = sadd.s32 %s241, 1
      %s243 = scalar_select %p240, %s241, %s242
      %p246 = pneg %p240
      %p247 = scmp.eq.s32.totalorder %s18, 3
      %p248 = por %p246, %p247
      %p249 = scmp.ne.s32.totalorder %s241, %s244
      %p250 = scmp.eq.s32.totalorder %s18, 0
      %p251 = por %p249, %p250
      %p252 = scmp.ne.s32.totalorder %s241, %s244
      %p253 = scmp.eq.s32.totalorder %s23, 3
      %p254 = por %p252, %p253
      %p255 = scmp.ne.s32.totalorder %s244, %s245
      %p256 = scmp.eq.s32.totalorder %s23, 0
      %p257 = por %p255, %p256
      %p258 = scmp.ne.s32.totalorder %s244, %s245
      %p259 = scmp.eq.s32.totalorder %s24, 3
      %p260 = por %p258, %p259
      %p262 = scmp.ne.s32.totalorder %s245, %s261
      %p263 = scmp.eq.s32.totalorder %s24, 0
      %p264 = por %p262, %p263
      %p265 = scmp.le.s32.totalorder 1, %s18
      %p266 = scmp.lt.s32.totalorder %s18, 5
      %p267 = pnand %p265, %p266
      %p268 = pneg %p267
      // Predicated region
      $region9: #{tpu_custom_call.1} parent=5 // pred_check
        _
      $region10: #{tpu_custom_call.1} parent=5 // pred_check_branch
        %270 = sbr.rel (%p267) target = $region12
      $region11: #{tpu_custom_call.1} parent=5 // pred_region
        %s271 = ssub.s32 %s18, 1
        // Predicated region
        $region13: #{tpu_custom_call.1} parent=11 // pred_check
          %p272 = pneg %p105
        $region14: #{tpu_custom_call.1} parent=11 // pred_check_branch
          %274 = sbr.rel (%p272) target = $region16
        $region15: #{tpu_custom_call.1} parent=11 // pred_region
          _
        $region16: #{tpu_custom_call.1} parent=11 // pred_fallthru
          _
        // Predicated region
        $region17: #{tpu_custom_call.1} parent=11 // pred_check
          %p275 = pneg %p126
        $region18: #{tpu_custom_call.1} parent=11 // pred_check_branch
          %277 = sbr.rel (%p275) target = $region20
        $region19: #{tpu_custom_call.1} parent=11 // pred_region
          _
        $region20: #{tpu_custom_call.1} parent=11 // pred_fallthru
          _
        // Predicated region
        $region21: #{tpu_custom_call.1} parent=11 // pred_check
          %p278 = pneg %p147
        $region22: #{tpu_custom_call.1} parent=11 // pred_check_branch
          %280 = sbr.rel (%p278) target = $region24
        $region23: #{tpu_custom_call.1} parent=11 // pred_region
          _
        $region24: #{tpu_custom_call.1} parent=11 // pred_fallthru
          _
        // Predicated region
        $region25: #{tpu_custom_call.1} parent=11 // pred_check
          %p281 = pneg %p168
        $region26: #{tpu_custom_call.1} parent=11 // pred_check_branch
          %283 = sbr.rel (%p281) target = $region28
        $region27: #{tpu_custom_call.1} parent=11 // pred_region
          _
        $region28: #{tpu_custom_call.1} parent=11 // pred_fallthru
          _
        // Predicated region
        $region29: #{tpu_custom_call.1} parent=11 // pred_check
          %p284 = pneg %p189
        $region30: #{tpu_custom_call.1} parent=11 // pred_check_branch
          %286 = sbr.rel (%p284) target = $region32
        $region31: #{tpu_custom_call.1} parent=11 // pred_region
          _
        $region32: #{tpu_custom_call.1} parent=11 // pred_fallthru
          _
        // Predicated region
        $region33: #{tpu_custom_call.1} parent=11 // pred_check
          %p287 = pneg %p210
        $region34: #{tpu_custom_call.1} parent=11 // pred_check_branch
          %289 = sbr.rel (%p287) target = $region36
        $region35: #{tpu_custom_call.1} parent=11 // pred_region
          _
        $region36: #{tpu_custom_call.1} parent=11 // pred_fallthru
          _
        // Predicated region
        $region37: #{tpu_custom_call.1} parent=11 // pred_check
          %p290 = pneg %p231
        $region38: #{tpu_custom_call.1} parent=11 // pred_check_branch
          %292 = sbr.rel (%p290) target = $region40
        $region39: #{tpu_custom_call.1} parent=11 // pred_region
          _
        $region40: #{tpu_custom_call.1} parent=11 // pred_fallthru
          _
      $region12: #{tpu_custom_call.1} parent=5 // pred_fallthru
        _
      %p293 = scmp.lt.s32.totalorder %s18, 4
      // Predicated region
      $region41: #{tpu_custom_call.1} parent=5 // pred_check
        %p294 = pneg %p293
      $region42: #{tpu_custom_call.1} parent=5 // pred_check_branch
        %296 = sbr.rel (%p294) target = $region44
      $region43: #{tpu_custom_call.1} parent=5 // pred_region
        // Predicated region
        $region45: #{tpu_custom_call.1} parent=43 // pred_check
          %p297 = pneg %p52
        $region46: #{tpu_custom_call.1} parent=43 // pred_check_branch
          %299 = sbr.rel (%p297) target = $region48
        $region47: #{tpu_custom_call.1} parent=43 // pred_region
          %s300 = smul.u32 2, %s26
          %p301 = scmp.lt.s32.totalorder %s25, 0
          %s302 = scalar_select %p301, %s25, 0
          %p303 = scmp.lt.s32.totalorder %s300, 7
          %s304 = scalar_select %p303, %s300, 7
          %s305 = smul.addr %s302, 8
          %s306 = sadd.s32 %s304, %s305
          %s307 = scalar_lea.vmem %s0, %s306
          %s308 = smul.u32 2, %s26
        $region48: #{tpu_custom_call.1} parent=43 // pred_fallthru
          _
        // Predicated region
        $region49: #{tpu_custom_call.1} parent=43 // pred_check
          %p309 = pneg %p78
        $region50: #{tpu_custom_call.1} parent=43 // pred_check_branch
          %311 = sbr.rel (%p309) target = $region52
        $region51: #{tpu_custom_call.1} parent=43 // pred_region
          %s312 = smul.u32 32, %s26
          %p313 = scmp.lt.s32.totalorder %s312, 127
          %s314 = scalar_select %p313, %s312, 127
          %s315 = smul.addr %s314, 4
          %s316 = scalar_lea.vmem %s1, %s315
          %s317 = smul.u32 32, %s26
        $region52: #{tpu_custom_call.1} parent=43 // pred_fallthru
          _
      $region44: #{tpu_custom_call.1} parent=5 // pred_fallthru
        _
      %p318 = scmp.le.s32.totalorder 1, %s18
      %p319 = scmp.lt.s32.totalorder %s18, 5
      %p320 = pnand %p318, %p319
      %p321 = pneg %p320
      // Predicated region
      $region53: #{tpu_custom_call.1} parent=5 // pred_check
        _
      $region54: #{tpu_custom_call.1} parent=5 // pred_check_branch
        %323 = sbr.rel (%p320) target = $region56
      $region55: #{tpu_custom_call.1} parent=5 // pred_region
        %s324 = ssub.s32 %s18, 1
        %s325 = smul.u32 2, %s28
        %p326 = scmp.lt.s32.totalorder %s27, 0
        %s327 = scalar_select %p326, %s27, 0
        %p328 = scmp.lt.s32.totalorder %s325, 7
        %s329 = scalar_select %p328, %s325, 7
        %s330 = smul.addr %s327, 8
        %s331 = sadd.s32 %s329, %s330
        %s332 = scalar_lea.vmem %s0, %s331
        %p333 = pneg %p58
        %p334 = pneg %p55
        %s335 = smul.u32 32, %s28
        %p336 = scmp.lt.s32.totalorder %s335, 127
        %s337 = scalar_select %p336, %s335, 127
        %s338 = smul.addr %s337, 4
        %s339 = scalar_lea.vmem %s1, %s338
        %p340 = pneg %p84
        %p341 = pneg %p81
        %p342 = pneg %p105
        %p343 = pneg %p102
        %p344 = pneg %p126
        %p345 = pneg %p123
        %p346 = pneg %p147
        %p347 = pneg %p144
        %p348 = pneg %p168
        %p349 = pneg %p165
        %p350 = pneg %p189
        %p351 = pneg %p186
        %p352 = pneg %p210
        %p353 = pneg %p207
        %p354 = pneg %p231
        %p355 = pneg %p228
        %p356 = pneg %p257
        %p357 = pneg %p254
        %s358 = smul.u32 2, %s28
        %p359 = scmp.lt.s32.totalorder %s27, 0
        %s360 = scalar_select %p359, %s27, 0
        %p361 = scmp.lt.s32.totalorder %s358, 7
        %s362 = scalar_select %p361, %s358, 7
        %s363 = smul.addr %s360, 8
        %s364 = sadd.s32 %s362, %s363
        %s365 = scalar_lea.vmem %s0, %s364
        %s366 = smul.u32 2, %s28
        %s367 = smul.u32 32, %s28
        %p368 = scmp.lt.s32.totalorder %s367, 127
        %s369 = scalar_select %p368, %s367, 127
        %s370 = smul.addr %s369, 4
        %s371 = scalar_lea.vmem %s1, %s370
        %s372 = smul.u32 32, %s28
        %p374 = scmp.eq.s32.totalorder %s28, 0
        // Predicated region
        $region57: #{tpu_custom_call.1} parent=55 // pred_check
          %p375 = pneg %p374
        $region58: #{tpu_custom_call.1} parent=55 // pred_check_branch
          %377 = sbr.rel (%p375) target = $region60
        $region59: #{tpu_custom_call.1} parent=55 // pred_region
          %vm378 = vcmask 254976
          %379 = vst.msk [vmem:[#allocation2] sm:$0x3] %vm378, 0.0
        $region60: #{tpu_custom_call.1} parent=55 // pred_fallthru
          _
        %v380 = vld [vmem:[#allocation2] sm:$0x3]
        %v381 = vld [vmem:[%s365] sm:$0x3]
        %v382 = vld [vmem:[%s371] sm:$0xf]
        %v383 = vld [vmem:[%s371 + $0x4] sm:$0xf]
        %v384 = vld [vmem:[%s371 + $0x8] sm:$0xf]
        %v385 = vld [vmem:[%s371 + $0xc] sm:$0xf]
        %v386 = vld [vmem:[%s371 + $0x10] sm:$0xf]
        %v387 = vld [vmem:[%s371 + $0x14] sm:$0xf]
        %v388 = vld [vmem:[%s371 + $0x18] sm:$0xf]
        %v389 = vld [vmem:[%s371 + $0x1c] sm:$0xf]
        %v390 = vld [vmem:[%s371 + $0x20] sm:$0xf]
        %v391 = vld [vmem:[%s371 + $0x24] sm:$0xf]
        %v392 = vld [vmem:[%s371 + $0x28] sm:$0xf]
        %v393 = vld [vmem:[%s371 + $0x2c] sm:$0xf]
        %v394 = vld [vmem:[%s371 + $0x30] sm:$0xf]
        %v395 = vld [vmem:[%s371 + $0x34] sm:$0xf]
        %v396 = vld [vmem:[%s371 + $0x38] sm:$0xf]
        %v397 = vld [vmem:[%s371 + $0x3c] sm:$0xf]
        %v398 = vld [vmem:[%s371 + $0x40] sm:$0xf]
        %v399 = vld [vmem:[%s371 + $0x44] sm:$0xf]
        %v400 = vld [vmem:[%s371 + $0x48] sm:$0xf]
        %v401 = vld [vmem:[%s371 + $0x4c] sm:$0xf]
        %v402 = vld [vmem:[%s371 + $0x50] sm:$0xf]
        %v403 = vld [vmem:[%s371 + $0x54] sm:$0xf]
        %v404 = vld [vmem:[%s371 + $0x58] sm:$0xf]
        %v405 = vld [vmem:[%s371 + $0x5c] sm:$0xf]
        %v406 = vld [vmem:[%s371 + $0x60] sm:$0xf]
        %v407 = vld [vmem:[%s371 + $0x64] sm:$0xf]
        %v408 = vld [vmem:[%s371 + $0x68] sm:$0xf]
        %v409 = vld [vmem:[%s371 + $0x6c] sm:$0xf]
        %v410 = vld [vmem:[%s371 + $0x70] sm:$0xf]
        %v411 = vld [vmem:[%s371 + $0x74] sm:$0xf]
        %v412 = vld [vmem:[%s371 + $0x78] sm:$0xf]
        %v413 = vld [vmem:[%s371 + $0x7c] sm:$0xf]
        %v416 = vunpack.c.l.s4 1966171168
        %v417 = vunpack.c.0.s8 %v416
        %v418 = vlaneseq
        %v419 = vshrl.u32 %v418, 7
        %v420 = vsub.s32 %v417, %v419
        %v421 = vrot.slane %v381, %v420
        %v422 = vcombine.high %v421, %v421
        %v424 = vunpack.c.l.s4 1966171168
        %v425 = vunpack.c.0.s8 %v424
        %v426 = vlaneseq
        %v427 = vshrl.u32 %v426, 7
        %v428 = vsub.s32 %v425, %v427
        %v429 = vrot.slane %v421, %v428
        %v431 = vunpack.c.l.s4 1966171168
        %v432 = vunpack.c.0.s8 %v431
        %v433 = vlaneseq
        %v434 = vshrl.u32 %v433, 7
        %v435 = vsub.s32 %v432, %v434
        %v436 = vrot.slane %v422, %v435
        %v471 = vunpack.c.l.b16 %v382
        %v472 = vunpack.c.l.b16 %v383
        %v473 = vunpack.c.l.b16 %v384
        %v474 = vunpack.c.l.b16 %v385
        %v475 = vunpack.c.l.b16 %v386
        %v476 = vunpack.c.l.b16 %v387
        %v477 = vunpack.c.l.b16 %v388
        %v478 = vunpack.c.l.b16 %v389
        %v479 = vunpack.c.l.b16 %v390
        %v480 = vunpack.c.l.b16 %v391
        %v481 = vunpack.c.l.b16 %v392
        %v482 = vunpack.c.l.b16 %v393
        %v483 = vunpack.c.l.b16 %v394
        %v484 = vunpack.c.l.b16 %v395
        %v485 = vunpack.c.l.b16 %v396
        %v486 = vunpack.c.l.b16 %v397
        %v487 = vunpack.c.l.b16 %v398
        %v488 = vunpack.c.l.b16 %v399
        %v489 = vunpack.c.l.b16 %v400
        %v490 = vunpack.c.l.b16 %v401
        %v491 = vunpack.c.l.b16 %v402
        %v492 = vunpack.c.l.b16 %v403
        %v493 = vunpack.c.l.b16 %v404
        %v494 = vunpack.c.l.b16 %v405
        %v495 = vunpack.c.l.b16 %v406
        %v496 = vunpack.c.l.b16 %v407
        %v497 = vunpack.c.l.b16 %v408
        %v498 = vunpack.c.l.b16 %v409
        %v499 = vunpack.c.l.b16 %v410
        %v500 = vunpack.c.l.b16 %v411
        %v501 = vunpack.c.l.b16 %v412
        %v502 = vunpack.c.l.b16 %v413
        %v503 = vpack.c.b16 %v472, %v471
        %v504 = vpack.c.b16 %v474, %v473
        %v505 = vpack.c.b16 %v476, %v475
        %v506 = vpack.c.b16 %v478, %v477
        %v507 = vpack.c.b16 %v480, %v479
        %v508 = vpack.c.b16 %v482, %v481
        %v509 = vpack.c.b16 %v484, %v483
        %v510 = vpack.c.b16 %v486, %v485
        %v511 = vpack.c.b16 %v488, %v487
        %v512 = vpack.c.b16 %v490, %v489
        %v513 = vpack.c.b16 %v492, %v491
        %v514 = vpack.c.b16 %v494, %v493
        %v515 = vpack.c.b16 %v496, %v495
        %v516 = vpack.c.b16 %v498, %v497
        %v517 = vpack.c.b16 %v500, %v499
        %v518 = vpack.c.b16 %v502, %v501
        %535 = vmatprep.subr.bf16.mxu0 0
        %536 = vmatpush1.bf16.msra.mxu0 %v510
        %537 = vmatprep.subr.bf16.mxu0 0
        %538 = vmatpush1.bf16.msra.mxu0 %v509
        %539 = vmatprep.subr.bf16.mxu0 0
        %540 = vmatpush1.bf16.msra.mxu0 %v508
        %541 = vmatprep.subr.bf16.mxu0 0
        %542 = vmatpush1.bf16.msra.mxu0 %v507
        %543 = vmatprep.subr.bf16.mxu0 0
        %544 = vmatpush1.bf16.msra.mxu0 %v506
        %545 = vmatprep.subr.bf16.mxu0 0
        %546 = vmatpush1.bf16.msra.mxu0 %v505
        %547 = vmatprep.subr.bf16.mxu0 0
        %548 = vmatpush1.bf16.msra.mxu0 %v504
        %549 = vmatprep.subr.bf16.mxu0 0
        %550 = vmatpush1.bf16.msra.mxu0 %v503
        %551 = vmatprep.subr.bf16.mxu0 0
        %552 = vmatpush2.bf16.msra.mxu0 %v518
        %553 = vmatprep.subr.bf16.mxu0 0
        %554 = vmatpush2.bf16.msra.mxu0 %v517
        %555 = vmatprep.subr.bf16.mxu0 0
        %556 = vmatpush2.bf16.msra.mxu0 %v516
        %557 = vmatprep.subr.bf16.mxu0 0
        %558 = vmatpush2.bf16.msra.mxu0 %v515
        %559 = vmatprep.subr.bf16.mxu0 0
        %560 = vmatpush2.bf16.msra.mxu0 %v514
        %561 = vmatprep.subr.bf16.mxu0 0
        %562 = vmatpush2.bf16.msra.mxu0 %v513
        %563 = vmatprep.subr.bf16.mxu0 0
        %564 = vmatpush2.bf16.msra.mxu0 %v512
        %565 = vmatprep.subr.bf16.mxu0 0
        %566 = vmatpush2.bf16.msra.mxu0 %v511
        %567 = vmatprep.mubr.bf16.mxu0 %v436
        %568 = vmatmul.mubr.bf16.gmra.mxu0 %v429
        %v569 = vpop.f32.mrf.mxu0
        %v570 = vadd.f32 0.0, %v569
        %v571 = vpop.f32.mrf.mxu0
        %v572 = vpop.f32.mrf.mxu0
        %v573 = vpop.f32.mrf.mxu0
        %574 = vdwg.mxu0
        %v575 = vadd.f32 %v380, %v570
        %vm576 = vcmask 254976
        %577 = vst.msk [vmem:[#allocation2] sm:$0x3] %vm576, %v575
        %p578 = scmp.eq.s32.totalorder %s28, 3
        // Predicated region
        $region61: #{tpu_custom_call.1} parent=55 // pred_check
          %p579 = pneg %p578
        $region62: #{tpu_custom_call.1} parent=55 // pred_check_branch
          %581 = sbr.rel (%p579) target = $region64
        $region63: #{tpu_custom_call.1} parent=55 // pred_region
          %v582 = vld [vmem:[#allocation2] sm:$0x3]
          %v583 = vld [vmem:[%s2] sm:$0x1]
          %v585 = vlaneseq
          %v586 = vshrl.u32 %v585, 7
          %v587 = vsub.s32 0, %v586
          %v588 = vrot.slane %v583, %v587
          %v590 = vadd.f32 %v582, %v588
          %s591 = sld [smem:[#allocation3]]
          %vm592 = vcmp.ge.f32.partialorder %v590, 0.0
          %v593 = vstv %s591
          %v594 = vmul.f32 %v593, %v590
          %v595 = vsel %vm592, %v590, %v594
          %v596 = vld [vmem:[%s4] sm:$0xff]
          %v597 = vld [vmem:[%s4 + $0x8] sm:$0xff]
          %v598 = vld [vmem:[%s4 + $0x10] sm:$0xff]
          %v599 = vld [vmem:[%s4 + $0x18] sm:$0xff]
          %v600 = vld [vmem:[%s5] sm:$0x1]
          %v602 = vlaneseq
          %v603 = vshrl.u32 %v602, 7
          %v604 = vsub.s32 0, %v603
          %v605 = vrot.slane %v600, %v604
          %vm607 = vcmask 261120
          %v609 = vsel %vm607, %v595, 0
          %611 = vmatprep.subr.mxu0 0.0
          %612 = vmatpush1.msra.mxu0 0.0
          %613 = vmatprep.subr.mxu0 0.0
          %614 = vmatpush1.msra.mxu0 0.0
          %615 = vmatprep.subr.mxu0 0.0
          %616 = vmatpush1.msra.mxu0 0.0
          %617 = vmatprep.subr.mxu0 0.0
          %618 = vmatpush1.msra.mxu0 0.0
          %619 = vmatprep.subr.mxu0 0.0
          %620 = vmatpush1.msra.mxu0 0.0
          %621 = vmatprep.subr.mxu0 0.0
          %622 = vmatpush1.msra.mxu0 0.0
          %623 = vmatprep.subr.mxu0 0.0
          %624 = vmatpush1.msra.mxu0 0.0
          %625 = vmatprep.subr.mxu0 0.0
          %626 = vmatpush1.msra.mxu0 0.0
          %627 = vmatprep.subr.mxu0 0.0
          %628 = vmatpush1.msra.mxu0 0.0
          %629 = vmatprep.subr.mxu0 0.0
          %630 = vmatpush1.msra.mxu0 0.0
          %631 = vmatprep.subr.mxu0 0.0
          %632 = vmatpush1.msra.mxu0 0.0
          %633 = vmatprep.subr.mxu0 0.0
          %634 = vmatpush1.msra.mxu0 0.0
          %635 = vmatprep.subr.mxu0 0.0
          %636 = vmatpush1.msra.mxu0 %v599
          %637 = vmatprep.subr.mxu0 0.0
          %638 = vmatpush1.msra.mxu0 %v598
          %639 = vmatprep.subr.mxu0 0.0
          %640 = vmatpush1.msra.mxu0 %v597
          %641 = vmatprep.subr.mxu0 0.0
          %642 = vmatpush1.msra.mxu0 %v596
          %643 = vmatprep.subr.mxu0 0.0
          %644 = vmatpush2.msra.mxu0 0.0
          %645 = vmatprep.subr.mxu0 0.0
          %646 = vmatpush2.msra.mxu0 0.0
          %647 = vmatprep.subr.mxu0 0.0
          %648 = vmatpush2.msra.mxu0 0.0
          %649 = vmatprep.subr.mxu0 0.0
          %650 = vmatpush2.msra.mxu0 0.0
          %651 = vmatprep.subr.mxu0 0.0
          %652 = vmatpush2.msra.mxu0 0.0
          %653 = vmatprep.subr.mxu0 0.0
          %654 = vmatpush2.msra.mxu0 0.0
          %655 = vmatprep.subr.mxu0 0.0
          %656 = vmatpush2.msra.mxu0 0.0
          %657 = vmatprep.subr.mxu0 0.0
          %658 = vmatpush2.msra.mxu0 0.0
          %659 = vmatprep.subr.mxu0 0.0
          %660 = vmatpush2.msra.mxu0 0.0
          %661 = vmatprep.subr.mxu0 0.0
          %662 = vmatpush2.msra.mxu0 0.0
          %663 = vmatprep.subr.mxu0 0.0
          %664 = vmatpush2.msra.mxu0 0.0
          %665 = vmatprep.subr.mxu0 0.0
          %666 = vmatpush2.msra.mxu0 0.0
          %667 = vmatprep.subr.mxu0 0.0
          %668 = vmatpush2.msra.mxu0 0.0
          %669 = vmatprep.subr.mxu0 0.0
          %670 = vmatpush2.msra.mxu0 0.0
          %671 = vmatprep.subr.mxu0 0.0
          %672 = vmatpush2.msra.mxu0 0.0
          %673 = vmatprep.subr.mxu0 0.0
          %674 = vmatpush2.msra.mxu0 0.0
          %675 = vmatprep.mubr.f32.mxu0 0.0
          %676 = vmatmul.mubr.f32.gmra.mxu0 %v609
          %v677 = vpop.f32.mrf.mxu0
          %v678 = vadd.f32 %v605, %v677
          %v679 = vpop.f32.mrf.mxu0
          %680 = vdwg.mxu0
          %s681 = sld [smem:[#allocation4]]
          %vm682 = vcmp.ge.f32.partialorder %v678, 0.0
          %v683 = vstv %s681
          %v684 = vmul.f32 %v683, %v678
          %v685 = vsel %vm682, %v678, %v684
          %v686 = vsub.f32 0.0, %v685
          %v687 = vmul.f32 %v686, 1.442695
          %v688 = vpow.pop %v687
          %v689 = vadd.f32 %v688, 1.0
          %v690 = vrcp.pop %v689
          %v691 = vld [vmem:[%s7] sm:$0xff]
          %v692 = vld [vmem:[%s7 + $0x8] sm:$0xff]
          %v693 = vld [vmem:[%s7 + $0x10] sm:$0xff]
          %v694 = vld [vmem:[%s7 + $0x18] sm:$0xff]
          %v695 = vld [vmem:[%s8] sm:$0x1]
          %v697 = vlaneseq
          %v698 = vshrl.u32 %v697, 7
          %v699 = vsub.s32 0, %v698
          %v700 = vrot.slane %v695, %v699
          %v703 = vsel %vm607, %v690, 0
          %705 = vmatprep.subr.mxu0 0.0
          %706 = vmatpush1.msra.mxu0 0.0
          %707 = vmatprep.subr.mxu0 0.0
          %708 = vmatpush1.msra.mxu0 0.0
          %709 = vmatprep.subr.mxu0 0.0
          %710 = vmatpush1.msra.mxu0 0.0
          %711 = vmatprep.subr.mxu0 0.0
          %712 = vmatpush1.msra.mxu0 0.0
          %713 = vmatprep.subr.mxu0 0.0
          %714 = vmatpush1.msra.mxu0 0.0
          %715 = vmatprep.subr.mxu0 0.0
          %716 = vmatpush1.msra.mxu0 0.0
          %717 = vmatprep.subr.mxu0 0.0
          %718 = vmatpush1.msra.mxu0 0.0
          %719 = vmatprep.subr.mxu0 0.0
          %720 = vmatpush1.msra.mxu0 0.0
          %721 = vmatprep.subr.mxu0 0.0
          %722 = vmatpush1.msra.mxu0 0.0
          %723 = vmatprep.subr.mxu0 0.0
          %724 = vmatpush1.msra.mxu0 0.0
          %725 = vmatprep.subr.mxu0 0.0
          %726 = vmatpush1.msra.mxu0 0.0
          %727 = vmatprep.subr.mxu0 0.0
          %728 = vmatpush1.msra.mxu0 0.0
          %729 = vmatprep.subr.mxu0 0.0
          %730 = vmatpush1.msra.mxu0 %v694
          %731 = vmatprep.subr.mxu0 0.0
          %732 = vmatpush1.msra.mxu0 %v693
          %733 = vmatprep.subr.mxu0 0.0
          %734 = vmatpush1.msra.mxu0 %v692
          %735 = vmatprep.subr.mxu0 0.0
          %736 = vmatpush1.msra.mxu0 %v691
          %737 = vmatprep.subr.mxu0 0.0
          %738 = vmatpush2.msra.mxu0 0.0
          %739 = vmatprep.subr.mxu0 0.0
          %740 = vmatpush2.msra.mxu0 0.0
          %741 = vmatprep.subr.mxu0 0.0
          %742 = vmatpush2.msra.mxu0 0.0
          %743 = vmatprep.subr.mxu0 0.0
          %744 = vmatpush2.msra.mxu0 0.0
          %745 = vmatprep.subr.mxu0 0.0
          %746 = vmatpush2.msra.mxu0 0.0
          %747 = vmatprep.subr.mxu0 0.0
          %748 = vmatpush2.msra.mxu0 0.0
          %749 = vmatprep.subr.mxu0 0.0
          %750 = vmatpush2.msra.mxu0 0.0
          %751 = vmatprep.subr.mxu0 0.0
          %752 = vmatpush2.msra.mxu0 0.0
          %753 = vmatprep.subr.mxu0 0.0
          %754 = vmatpush2.msra.mxu0 0.0
          %755 = vmatprep.subr.mxu0 0.0
          %756 = vmatpush2.msra.mxu0 0.0
          %757 = vmatprep.subr.mxu0 0.0
          %758 = vmatpush2.msra.mxu0 0.0
          %759 = vmatprep.subr.mxu0 0.0
          %760 = vmatpush2.msra.mxu0 0.0
          %761 = vmatprep.subr.mxu0 0.0
          %762 = vmatpush2.msra.mxu0 0.0
          %763 = vmatprep.subr.mxu0 0.0
          %764 = vmatpush2.msra.mxu0 0.0
          %765 = vmatprep.subr.mxu0 0.0
          %766 = vmatpush2.msra.mxu0 0.0
          %767 = vmatprep.subr.mxu0 0.0
          %768 = vmatpush2.msra.mxu0 0.0
          %769 = vmatprep.mubr.f32.mxu0 0.0
          %770 = vmatmul.mubr.f32.gmra.mxu0 %v703
          %v771 = vpop.f32.mrf.mxu0
          %v772 = vadd.f32 %v700, %v771
          %v773 = vpop.f32.mrf.mxu0
          %774 = vdwg.mxu0
          %775 = vst [vmem:[#allocation5] sm:$0x3] %v772
        $region64: #{tpu_custom_call.1} parent=55 // pred_fallthru
          _
        // Predicated region
        $region65: #{tpu_custom_call.1} parent=55 // pred_check
          %p776 = pneg %p254
        $region66: #{tpu_custom_call.1} parent=55 // pred_check_branch
          %778 = sbr.rel (%p776) target = $region68
        $region67: #{tpu_custom_call.1} parent=55 // pred_region
          %s780 = ssub.s32 32, 32
          %781 = vsyncadd [#allocation6], %s780
          %s782 = smul.addr %s27, 32
          %s783 = scalar_lea.hbm %s9, %s782
          %s785 = sshll.u32 [#allocation5], 4
          %s786 = int_to_ptr.vmem [resolvable:$true] %s785
          %788 = dma.vmem_to_hbm [thread:$0]  %s786, 32, %s783, [#allocation6]
        $region68: #{tpu_custom_call.1} parent=55 // pred_fallthru
          _
        // Predicated region
        $region69: #{tpu_custom_call.1} parent=55 // pred_check
          %p789 = pneg %p254
        $region70: #{tpu_custom_call.1} parent=55 // pred_check_branch
          %791 = sbr.rel (%p789) target = $region72
        $region71: #{tpu_custom_call.1} parent=55 // pred_region
          %792 = dma.done [#allocation6], 32
        $region72: #{tpu_custom_call.1} parent=55 // pred_fallthru
          _
      $region56: #{tpu_custom_call.1} parent=5 // pred_fallthru
        _
      %p793 = scmp.le.s32.totalorder 2, %s18
      // Predicated region
      $region73: #{tpu_custom_call.1} parent=5 // pred_check
        %p794 = pneg %p793
      $region74: #{tpu_custom_call.1} parent=5 // pred_check_branch
        %796 = sbr.rel (%p794) target = $region76
      $region75: #{tpu_custom_call.1} parent=5 // pred_region
        %s797 = ssub.s32 %s18, 2
      $region76: #{tpu_custom_call.1} parent=5 // pred_fallthru
        _
    $region6: #{tpu_custom_call.1} parent=1 // loop_footer
      %s22 = sadd.s32 1, %s18
    $region7: #{tpu_custom_call.1} parent=1 // loop_footer_branch
      %17 = sbr.rel target = $region3
    $region8: #{tpu_custom_call.1} parent=1 // loop_exit
      _
    %798 = vsyncpa [#allocation6], 1
    %s799 = scalar_lea.sflag [#allocation6], 1
    %800 = vsyncpa %s799, 1

</llo_original>
